<compile_context>
chip_gen: v7x
topology: tpu7x:2x2x1
jax: 0.10.0
libtpu: 0.0.40
codegen_flags: <defaults>
</compile_context>

<pallas_src>
import jax
import jax.numpy as jnp
from jax.experimental import pallas as pl
from jax.experimental.pallas import tpu as pltpu


def _round_up(x, m):
    return ((x + m - 1) // m) * m


# ---------------------------------------------------------------------------------------------
# Kernels
# ---------------------------------------------------------------------------------------------
def _layer_ibf_scale_kernel(under_t_ref, over_t_ref, s_pos_ref, s_neg_ref,
                            out_under_ref, out_over_ref):
    """One grid step = `nb` output neurons x one P tile.

    under_t_ref / over_t_ref : (M, tP)   transposed IBF tensors (lane axis = IBF rows)
    s_pos_ref / s_neg_ref    : (nb, tP)  per-neuron weight selectors for this block
    out_under_ref / out_over : (2, nb, M, tP)
        out_under[0, n] = over^T  * s_neg[n]     out_over[0, n] = over^T  * s_pos[n]
        out_under[1, n] = under^T * s_pos[n]     out_over[1, n] = under^T * s_neg[n]
    """
    un = under_t_ref[...]                          # (M, tP)
    ov = over_t_ref[...]                           # (M, tP)
    sp = s_pos_ref[...][:, None, :]                # (nb, 1, tP)
    sn = s_neg_ref[...][:, None, :]                # (nb, 1, tP)
    dt = out_under_ref.dtype
    # Direct slice stores -- no concatenate temporaries.  Cast happens only at the store.
    out_under_ref[0, :, :, :] = (sn * ov[None]).astype(dt)
    out_under_ref[1, :, :, :] = (sp * un[None]).astype(dt)
    out_over_ref[0, :, :, :] = (sp * ov[None]).astype(dt)
    out_over_ref[1, :, :, :] = (sn * un[None]).astype(dt)


def _layer_ibf_scale_shared_kernel(x_t_ref, s_pos_ref, s_neg_ref, out_ref):
    """Fast path for inputs_under is inputs_over (network's first layer).

    Only two of the four products are unique; a single (2, nb, M, tP) slab is written and
    the 'over' result is the axis-0 flip of the 'under' one -> half the HBM writes.
    """
    x = x_t_ref[...]                               # (M, tP)
    sp = s_pos_ref[...][:, None, :]                # (nb, 1, tP)
    sn = s_neg_ref[...][:, None, :]
    dt = out_ref.dtype
    out_ref[0, :, :, :] = (sn * x[None]).astype(dt)   # under half 0  ==  over half 1
    out_ref[1, :, :, :] = (sp * x[None]).astype(dt)   # under half 1  ==  over half 0


# ---------------------------------------------------------------------------------------------
# Wrapper helpers
# ---------------------------------------------------------------------------------------------
def _weight_selectors(layer_weights, n_vars, n_terms, dtype):
    """Per-IBF-row scale factors, exactly ibf_tensor_prod_input_weights.

    Row r = in_idx*(n_terms*n_vars) + t*n_vars + v is scaled by relu(+/-W)[:, in_idx]
    iff v == 0, otherwise 1.  Built with broadcast + mask (no XLA gather).
    """
    layer_size, w_in = layer_weights.shape
    w_pos = jnp.maximum(layer_weights, 0.0)          # relu(W)
    w_neg = -jnp.maximum(-layer_weights, 0.0)        # -relu(-W)
    var_is_scaled = jnp.arange(n_vars) == 0          # only the first var slot of each term

    def build(w):
        wb = jnp.broadcast_to(w[:, :, None, None], (layer_size, w_in, n_terms, n_vars))
        sel = jnp.where(var_is_scaled[None, None, None, :], wb, 1.0)
        return sel.reshape(layer_size, w_in * n_terms * n_vars).astype(dtype)

    return build(w_pos), build(w_neg)


def _choose_tiles(layer_size, m_pad, p_rows, n_in, n_out, in_itemsize, out_itemsize,
                  neuron_block, p_tile, vmem_budget_bytes):
    """Pick neuron block nb and P tile tP so double-buffered blocks fit `vmem_budget_bytes`.

    Budget defaults to 20 MiB -> fits the scoped-VMEM defaults / physical VMEM on v5e, v6e
    and v7x (64 MiB physical) with headroom; larger tiles are picked automatically when the
    problem is small, which amortizes the ~0.35 us/step grid overhead on v6e/v5e.
    """
    p_pad = _round_up(p_rows, 128)

    def need(nb, tp):
        ins = 2 * n_in * m_pad * tp * in_itemsize                 # IBF tensors (dbl-buffered)
        sels = 2 * 2 * nb * tp * in_itemsize                      # s_pos / s_neg blocks
        outs = 2 * n_out * 2 * nb * m_pad * tp * out_itemsize     # output slabs
        return ins + sels + outs

    # P tile: multiple of 128 dividing the padded row count, as large as the budget allows.
    desired = 2048 if p_tile is None else max(128, (p_tile // 128) * 128)
    candidates = [t for t in range(128, p_pad + 1, 128) if p_pad % t == 0]
    fitting = [t for t in candidates if t <= desired and need(8, t) <= vmem_budget_bytes]
    tp = max(fitting) if fitting else 128

    l_cap = max(8, _round_up(layer_size, 8))
    if neuron_block is None:
        neuron_block = 8
        for cand in (64, 32, 16, 8):
            if cand <= l_cap and need(cand, tp) <= vmem_budget_bytes:
                neuron_block = cand
                break
    nb = max(8, (min(neuron_block, l_cap) // 8) * 8)
    l_pad = _round_up(layer_size, nb)
    return nb, l_pad, tp, p_pad


def to_reference_layout(native):
    """(2, L, M, P) kernel-native -> (L*2*P, M) PyTorch reference row order.

    Only call at the network boundary: it re-reads / re-writes the whole tensor, which is
    the single biggest cost when done per layer.
    """
    two, layer_size, m, p = native.shape
    return native.transpose(1, 0, 3, 2).reshape(layer_size * two * p, m)


# ---------------------------------------------------------------------------------------------
# Public entry points
# ---------------------------------------------------------------------------------------------
def layer_ibf_products(inputs_under, inputs_over, layer_weights, *, n_vars,
                       neuron_block=None, p_tile=None, out_dtype=None,
                       reference_layout=True, vmem_budget_bytes=20 * 1024 * 1024):
    """Batched (over output neurons) LayerModule pre-activation IBF products.

    reference_layout=True  -> two (layer_size*2*P, M) arrays in PyTorch row order.
    reference_layout=False -> two kernel-native (2, layer_size, M, P) arrays (use this when
                              chaining layers; convert once at the network boundary).
    """
    p_rows, m = inputs_under.shape
    layer_size, w_in = layer_weights.shape
    n_terms = p_rows // (w_in * n_vars)
    assert n_terms * w_in * n_vars == p_rows, \
        "IBF row count must equal in_neurons * n_terms * n_vars"
    in_dtype = inputs_under.dtype
    out_dtype = in_dtype if out_dtype is None else out_dtype

    s_pos, s_neg = _weight_selectors(layer_weights, n_vars, n_terms, in_dtype)

    m_pad = _round_up(m, 8)
    nb, l_pad, tp, p_pad = _choose_tiles(
        layer_size, m_pad, p_rows, 2, 2,
        jnp.dtype(in_dtype).itemsize, jnp.dtype(out_dtype).itemsize,
        neuron_block, p_tile, vmem_budget_bytes)

    # Lane-dense, padded operands: the (large) IBF-row axis P sits on the 128-lane axis.
    under_t = jnp.pad(inputs_under.T, ((0, m_pad - m), (0, p_pad - p_rows)))
    over_t = jnp.pad(inputs_over.T, ((0, m_pad - m), (0, p_pad - p_rows)))
    s_pos = jnp.pad(s_pos, ((0, l_pad - layer_size), (0, p_pad - p_rows)))
    s_neg = jnp.pad(s_neg, ((0, l_pad - layer_size), (0, p_pad - p_rows)))

    grid = (l_pad // nb, p_pad // tp)
    grid_spec = pltpu.PrefetchScalarGridSpec(
        num_scalar_prefetch=0,
        grid=grid,
        in_specs=[
            pl.BlockSpec((m_pad, tp), lambda i, j: (0, j)),        # under^T tile
            pl.BlockSpec((m_pad, tp), lambda i, j: (0, j)),        # over^T tile
            pl.BlockSpec((nb, tp), lambda i, j: (i, j)),           # s_pos block
            pl.BlockSpec((nb, tp), lambda i, j: (i, j)),           # s_neg block
        ],
        out_specs=[
            pl.BlockSpec((2, nb, m_pad, tp), lambda i, j: (0, i, 0, j)),
            pl.BlockSpec((2, nb, m_pad, tp), lambda i, j: (0, i, 0, j)),
        ],
    )
    out_shape = (
        jax.ShapeDtypeStruct((2, l_pad, m_pad, p_pad), out_dtype),
        jax.ShapeDtypeStruct((2, l_pad, m_pad, p_pad), out_dtype),
    )
    out_under, out_over = pl.pallas_call(
        _layer_ibf_scale_kernel,
        out_shape=out_shape,
        grid_spec=grid_spec,
        compiler_params=pltpu.CompilerParams(
            dimension_semantics=("parallel", "parallel"),
            vmem_limit_bytes=32 * 1024 * 1024,   # safe on v5e/v6e/v7x; above v5e's 16 MiB default
        ),
    )(under_t, over_t, s_pos, s_neg)

    # Strip neuron/M/P padding (no-op copies when the shapes were already aligned).
    out_under = out_under[:, :layer_size, :m, :p_rows]
    out_over = out_over[:, :layer_size, :m, :p_rows]
    if not reference_layout:
        return out_under, out_over
    return to_reference_layout(out_under), to_reference_layout(out_over)


def layer_ibf_products_shared(inputs, layer_weights, *, n_vars,
                              neuron_block=None, p_tile=None, out_dtype=None,
                              reference_layout=False, vmem_budget_bytes=20 * 1024 * 1024):
    """Fast path for inputs_under is inputs_over: one output slab, 'over' is its axis-0 flip."""
    p_rows, m = inputs.shape
    layer_size, w_in = layer_weights.shape
    n_terms = p_rows // (w_in * n_vars)
    assert n_terms * w_in * n_vars == p_rows
    in_dtype = inputs.dtype
    out_dtype = in_dtype if out_dtype is None else out_dtype

    s_pos, s_neg = _weight_selectors(layer_weights, n_vars, n_terms, in_dtype)

    m_pad = _round_up(m, 8)
    nb, l_pad, tp, p_pad = _choose_tiles(
        layer_size, m_pad, p_rows, 1, 1,
        jnp.dtype(in_dtype).itemsize, jnp.dtype(out_dtype).itemsize,
        neuron_block, p_tile, vmem_budget_bytes)

    x_t = jnp.pad(inputs.T, ((0, m_pad - m), (0, p_pad - p_rows)))
    s_pos = jnp.pad(s_pos, ((0, l_pad - layer_size), (0, p_pad - p_rows)))
    s_neg = jnp.pad(s_neg, ((0, l_pad - layer_size), (0, p_pad - p_rows)))

    grid = (l_pad // nb, p_pad // tp)
    grid_spec = pltpu.PrefetchScalarGridSpec(
        num_scalar_prefetch=0,
        grid=grid,
        in_specs=[
            pl.BlockSpec((m_pad, tp), lambda i, j: (0, j)),
            pl.BlockSpec((nb, tp), lambda i, j: (i, j)),
            pl.BlockSpec((nb, tp), lambda i, j: (i, j)),
        ],
        out_specs=pl.BlockSpec((2, nb, m_pad, tp), lambda i, j: (0, i, 0, j)),
    )
    out = pl.pallas_call(
        _layer_ibf_scale_shared_kernel,
        out_shape=jax.ShapeDtypeStruct((2, l_pad, m_pad, p_pad), out_dtype),
        grid_spec=grid_spec,
        compiler_params=pltpu.CompilerParams(
            dimension_semantics=("parallel", "parallel"),
            vmem_limit_bytes=32 * 1024 * 1024,
        ),
    )(x_t, s_pos, s_neg)

    out = out[:, :layer_size, :m, :p_rows]
    under_native = out
    over_native = out[::-1]                # over halves are the swapped under halves
    if not reference_layout:
        return under_native, over_native
    return to_reference_layout(under_native), to_reference_layout(over_native)


def network_forward(inputs, network_weights, network_biases, n_vars, *, reference_layout=True):
    """NetworkModule.forward restricted to the parts with provided source (first layer's
    pre-activation IBF node polynomials).  inputs_under is inputs_over at the first layer,
    so the shared-input fast path is used."""
    # TODO(synk): add_with_constant (folding layer_biases into the constant IBF term) and the
    #             NodeModule ReLU relaxation (ibf_minmax, relu_monom_coeffs, quad_of_poly)
    #             have no provided implementation; biases are dropped here.
    del network_biases
    return layer_ibf_products_shared(inputs, network_weights[0], n_vars=n_vars,
                                     reference_layout=reference_layout)


# ---------------------------------------------------------------------------------------------
# Verification helpers + demo
# ---------------------------------------------------------------------------------------------
def _ref_ibf_tensor_prod(n_vars, inputs, weights):
    """Pure-JAX mirror of the PyTorch ibf_tensor_prod_input_weights (verification only)."""
    p, m = inputs.shape
    w = weights.shape[0]
    n_terms = p // w // n_vars
    rep = jnp.repeat(weights, repeats=n_terms * m, axis=0)
    term_scale = rep.reshape(-1, m)
    ones = jnp.ones_like(inputs)
    ones = ones.at[jnp.arange(0, p, n_vars), :].set(term_scale)
    return (inputs * ones).reshape(-1, m)


if __name__ == "__main__":
    key = jax.random.PRNGKey(0)
    n_vars = 2
    n_terms = 2
    in_neurons = 8             # network_size[0]
    layer_size = 12            # network_size[1] (not a multiple of the neuron block -> padding)
    max_degree_cols = 8        # max_degree + 1  (M)
    P = in_neurons * n_terms * n_vars   # 32 IBF rows (padded to 128 lanes inside the wrapper)

    k1, k2, k3, k4 = jax.random.split(key, 4)
    inputs_under = jax.random.normal(k1, (P, max_degree_cols), dtype=jnp.float32)
    inputs_over = jax.random.normal(k2, (P, max_degree_cols), dtype=jnp.float32)
    layer_weights = jax.random.normal(k3, (layer_size, in_neurons), dtype=jnp.float32)
    layer_biases = jax.random.normal(k4, (layer_size,), dtype=jnp.float32)  # unused (TODO above)

    # Kernel-native layout (what chained layers would consume)...
    under_nat, over_nat = layer_ibf_products(inputs_under, inputs_over, layer_weights,
                                             n_vars=n_vars, reference_layout=False)
    jax.block_until_ready((under_nat, over_nat))
    # ...converted once at the boundary for verification against the PyTorch row order.
    under = to_reference_layout(under_nat)
    over = to_reference_layout(over_nat)

    # Network-level entry point (shared-input fast path, under == over == inputs_under).
    net_under, net_over = network_forward(inputs_under, [layer_weights], [layer_biases], n_vars)
    jax.block_until_ready((net_under, net_over))

    # ---- Verify against a pure-JAX transcription of the PyTorch reference. -----------------
    w_pos = jnp.maximum(layer_weights, 0.0)
    w_neg = -jnp.maximum(-layer_weights, 0.0)
    ref_under, ref_over = [], []
    for i in range(layer_size):
        u1 = _ref_ibf_tensor_prod(n_vars, inputs_over, w_neg[i].reshape(-1, 1))
        u2 = _ref_ibf_tensor_prod(n_vars, inputs_under, w_pos[i].reshape(-1, 1))
        o1 = _ref_ibf_tensor_prod(n_vars, inputs_over, w_pos[i].reshape(-1, 1))
        o2 = _ref_ibf_tensor_prod(n_vars, inputs_under, w_neg[i].reshape(-1, 1))
        ref_under.append(jnp.concatenate([u1, u2], axis=0))
        ref_over.append(jnp.concatenate([o1, o2], axis=0))
    ref_under = jnp.concatenate(ref_under, axis=0)
    ref_over = jnp.concatenate(ref_over, axis=0)

    assert under.shape == ref_under.shape and over.shape == ref_over.shape
    assert jnp.allclose(under, ref_under, atol=1e-5)
    assert jnp.allclose(over, ref_over, atol=1e-5)

    # network_forward path (under == over == inputs_under).
    ref_nu, ref_no = [], []
    for i in range(layer_size):
        a = _ref_ibf_tensor_prod(n_vars, inputs_under, w_neg[i].reshape(-1, 1))
        b = _ref_ibf_tensor_prod(n_vars, inputs_under, w_pos[i].reshape(-1, 1))
        ref_nu.append(jnp.concatenate([a, b], axis=0))
        ref_no.append(jnp.concatenate([b, a], axis=0))
    assert jnp.allclose(net_under, jnp.concatenate(ref_nu, axis=0), atol=1e-5)
    assert jnp.allclose(net_over, jnp.concatenate(ref_no, axis=0), atol=1e-5)

    print("KERNEL_OK")
</pallas_src>

<mosaic_0001>
module attributes {stable_mosaic.version = 11 : i64} {
  func.func @_layer_ibf_scale_kernel(%arg0: i32, %arg1: i32, %arg2: memref<8x128xf32, #tpu.memory_space<vmem>>, %arg3: memref<8x128xf32, #tpu.memory_space<vmem>>, %arg4: memref<16x128xf32, #tpu.memory_space<vmem>>, %arg5: memref<16x128xf32, #tpu.memory_space<vmem>>, %arg6: memref<2x16x8x128xf32, #tpu.memory_space<vmem>>, %arg7: memref<2x16x8x128xf32, #tpu.memory_space<vmem>>) attributes {dimension_semantics = [#tpu.dimension_semantics<parallel>, #tpu.dimension_semantics<parallel>], iteration_bounds = array<i64: 1, 1>, scalar_prefetch = 0 : i64, scratch_operands = 0 : i64, tpu.core_type = #tpu.core_type<tc>, window_params = [{transform_indices = @transform_0, window_bounds = array<i64: 8, 128>}, {transform_indices = @transform_1, window_bounds = array<i64: 8, 128>}, {transform_indices = @transform_2, window_bounds = array<i64: 16, 128>}, {transform_indices = @transform_3, window_bounds = array<i64: 16, 128>}, {transform_indices = @transform_4, window_bounds = array<i64: 2, 16, 8, 128>}, {transform_indices = @transform_5, window_bounds = array<i64: 2, 16, 8, 128>}]} {
    %c0 = arith.constant 0 : index
    %c0_0 = arith.constant 0 : index
    %0 = vector.load %arg2[%c0, %c0_0] : memref<8x128xf32, #tpu.memory_space<vmem>>, vector<8x128xf32>
    %c0_1 = arith.constant 0 : index
    %c0_2 = arith.constant 0 : index
    %1 = vector.load %arg3[%c0_1, %c0_2] : memref<8x128xf32, #tpu.memory_space<vmem>>, vector<8x128xf32>
    %c0_3 = arith.constant 0 : index
    %c0_4 = arith.constant 0 : index
    %2 = vector.load %arg4[%c0_3, %c0_4] : memref<16x128xf32, #tpu.memory_space<vmem>>, vector<16x128xf32>
    %3 = vector.shape_cast %2 : vector<16x128xf32> to vector<16x1x128xf32>
    %c0_5 = arith.constant 0 : index
    %c0_6 = arith.constant 0 : index
    %4 = vector.load %arg5[%c0_5, %c0_6] : memref<16x128xf32, #tpu.memory_space<vmem>>, vector<16x128xf32>
    %5 = vector.shape_cast %4 : vector<16x128xf32> to vector<16x1x128xf32>
    %6 = vector.shape_cast %1 : vector<8x128xf32> to vector<1x8x128xf32>
    %7 = vector.broadcast %5 : vector<16x1x128xf32> to vector<16x8x128xf32>
    %8 = vector.broadcast %6 : vector<1x8x128xf32> to vector<16x8x128xf32>
    %9 = arith.mulf %7, %8 : vector<16x8x128xf32>
    %c0_7 = arith.constant 0 : index
    %c0_8 = arith.constant 0 : index
    %c0_9 = arith.constant 0 : index
    %c0_10 = arith.constant 0 : index
    %10 = vector.load %arg6[%c0_7, %c0_8, %c0_9, %c0_10] : memref<2x16x8x128xf32, #tpu.memory_space<vmem>>, vector<1x16x8x128xf32>
    %11 = vector.shape_cast %10 : vector<1x16x8x128xf32> to vector<16x8x128xf32>
    %12 = vector.shape_cast %9 : vector<16x8x128xf32> to vector<1x16x8x128xf32>
    tpu.vector_store %arg6[%c0_7, %c0_8, %c0_9, %c0_10], %12 {strides = array<i32>} : memref<2x16x8x128xf32, #tpu.memory_space<vmem>>, vector<1x16x8x128xf32>,
    %13 = vector.shape_cast %0 : vector<8x128xf32> to vector<1x8x128xf32>
    %14 = vector.broadcast %3 : vector<16x1x128xf32> to vector<16x8x128xf32>
    %15 = vector.broadcast %13 : vector<1x8x128xf32> to vector<16x8x128xf32>
    %16 = arith.mulf %14, %15 : vector<16x8x128xf32>
    %c1 = arith.constant 1 : index
    %c0_11 = arith.constant 0 : index
    %c0_12 = arith.constant 0 : index
    %c0_13 = arith.constant 0 : index
    %17 = vector.load %arg6[%c1, %c0_11, %c0_12, %c0_13] : memref<2x16x8x128xf32, #tpu.memory_space<vmem>>, vector<1x16x8x128xf32>
    %18 = vector.shape_cast %17 : vector<1x16x8x128xf32> to vector<16x8x128xf32>
    %19 = vector.shape_cast %16 : vector<16x8x128xf32> to vector<1x16x8x128xf32>
    tpu.vector_store %arg6[%c1, %c0_11, %c0_12, %c0_13], %19 {strides = array<i32>} : memref<2x16x8x128xf32, #tpu.memory_space<vmem>>, vector<1x16x8x128xf32>,
    %20 = vector.shape_cast %1 : vector<8x128xf32> to vector<1x8x128xf32>
    %21 = vector.broadcast %3 : vector<16x1x128xf32> to vector<16x8x128xf32>
    %22 = vector.broadcast %20 : vector<1x8x128xf32> to vector<16x8x128xf32>
    %23 = arith.mulf %21, %22 : vector<16x8x128xf32>
    %c0_14 = arith.constant 0 : index
    %c0_15 = arith.constant 0 : index
    %c0_16 = arith.constant 0 : index
    %c0_17 = arith.constant 0 : index
    %24 = vector.load %arg7[%c0_14, %c0_15, %c0_16, %c0_17] : memref<2x16x8x128xf32, #tpu.memory_space<vmem>>, vector<1x16x8x128xf32>
    %25 = vector.shape_cast %24 : vector<1x16x8x128xf32> to vector<16x8x128xf32>
    %26 = vector.shape_cast %23 : vector<16x8x128xf32> to vector<1x16x8x128xf32>
    tpu.vector_store %arg7[%c0_14, %c0_15, %c0_16, %c0_17], %26 {strides = array<i32>} : memref<2x16x8x128xf32, #tpu.memory_space<vmem>>, vector<1x16x8x128xf32>,
    %27 = vector.shape_cast %0 : vector<8x128xf32> to vector<1x8x128xf32>
    %28 = vector.broadcast %5 : vector<16x1x128xf32> to vector<16x8x128xf32>
    %29 = vector.broadcast %27 : vector<1x8x128xf32> to vector<16x8x128xf32>
    %30 = arith.mulf %28, %29 : vector<16x8x128xf32>
    %c1_18 = arith.constant 1 : index
    %c0_19 = arith.constant 0 : index
    %c0_20 = arith.constant 0 : index
    %c0_21 = arith.constant 0 : index
    %31 = vector.load %arg7[%c1_18, %c0_19, %c0_20, %c0_21] : memref<2x16x8x128xf32, #tpu.memory_space<vmem>>, vector<1x16x8x128xf32>
    %32 = vector.shape_cast %31 : vector<1x16x8x128xf32> to vector<16x8x128xf32>
    %33 = vector.shape_cast %30 : vector<16x8x128xf32> to vector<1x16x8x128xf32>
    tpu.vector_store %arg7[%c1_18, %c0_19, %c0_20, %c0_21], %33 {strides = array<i32>} : memref<2x16x8x128xf32, #tpu.memory_space<vmem>>, vector<1x16x8x128xf32>,
    return
  }
  func.func @transform_0(%arg0: i32, %arg1: i32) -> (i32, i32) {
    %c0_i32 = arith.constant 0 : i32
    %c0_i32_0 = arith.constant 0 : i32
    return %c0_i32, %arg1 : i32, i32
  }
  func.func @transform_1(%arg0: i32, %arg1: i32) -> (i32, i32) {
    %c0_i32 = arith.constant 0 : i32
    %c0_i32_0 = arith.constant 0 : i32
    return %c0_i32, %arg1 : i32, i32
  }
  func.func @transform_2(%arg0: i32, %arg1: i32) -> (i32, i32) {
    %c0_i32 = arith.constant 0 : i32
    return %arg0, %arg1 : i32, i32
  }
  func.func @transform_3(%arg0: i32, %arg1: i32) -> (i32, i32) {
    %c0_i32 = arith.constant 0 : i32
    return %arg0, %arg1 : i32, i32
  }
  func.func @transform_4(%arg0: i32, %arg1: i32) -> (i32, i32, i32, i32) {
    %c0_i32 = arith.constant 0 : i32
    %c0_i32_0 = arith.constant 0 : i32
    %c0_i32_1 = arith.constant 0 : i32
    return %c0_i32, %arg0, %c0_i32_0, %arg1 : i32, i32, i32, i32
  }
  func.func @transform_5(%arg0: i32, %arg1: i32) -> (i32, i32, i32, i32) {
    %c0_i32 = arith.constant 0 : i32
    %c0_i32_0 = arith.constant 0 : i32
    %c0_i32_1 = arith.constant 0 : i32
    return %c0_i32, %arg0, %c0_i32_0, %arg1 : i32, i32, i32, i32
  }
}

</mosaic_0001>

<llo_original>
// kernel: tpu_custom_call.1
$region0: #{tpu_custom_call.1}
  #allocation0 [shape = 'u32[]', space=smem, size = 0x4, offset = 0x4, fixed_abs, tag = 'smem constant byte address 0x4 - core index']
  #allocation1 [shape = 'u32[144,128]{1,0:T(1,128)}', space=vmem, size = 0x12000, scoped, tag = 'internal scratch']
  %s0 = inlined_call_operand.hbm [shape: f32[8,128], index: 0, kind: input, shape index: {}]
  %s1 = inlined_call_operand.hbm [shape: f32[8,128], index: 1, kind: input, shape index: {}]
  %s2 = inlined_call_operand.hbm [shape: f32[16,128], index: 2, kind: input, shape index: {}]
  %s3 = inlined_call_operand.hbm [shape: f32[16,128], index: 3, kind: input, shape index: {}]
  %s4 = inlined_call_operand.hbm [shape: f32[2,16,8,128], index: 4, kind: output, shape index: {0}]
  %s5 = inlined_call_operand.hbm [shape: f32[2,16,8,128], index: 5, kind: output, shape index: {1}]
  %6 = xla_tuple %s4, %s5
  %s7 = sld [smem:[#allocation0]]
  $region50: #{tpu_custom_call.1} parent=0
    _
  %s9 = ssub.s32 1, %s7
  %s10 = scalar_select 0, %s9, %s7
  $region1: #{tpu_custom_call.1} parent=0
    #allocation2 [shape = 'u8[4096]{0}', space=vmem, size = 0x1000, scoped, tag = 'input window, operand 0, single buffered']
    #allocation3 [shape = 's32[1]{0}', space=sflag, size = 0x4, scoped, tag = 'scoped memory for tpu_custom_call.1']
    #allocation4 [shape = 's32[1]{0}', space=sflag, size = 0x4, scoped, tag = 'scoped memory for tpu_custom_call.1']
    #allocation5 [shape = 'u8[4096]{0}', space=vmem, size = 0x1000, scoped, tag = 'input window, operand 1, single buffered']
    #allocation6 [shape = 's32[1]{0}', space=sflag, size = 0x4, scoped, tag = 'scoped memory for tpu_custom_call.1']
    #allocation7 [shape = 'u8[8192]{0}', space=vmem, size = 0x2000, scoped, tag = 'input window, operand 2, single buffered']
    #allocation8 [shape = 'u8[8192]{0}', space=vmem, size = 0x2000, scoped, tag = 'input window, operand 3, single buffered']
    #allocation9 [shape = 's32[1]{0}', space=sflag, size = 0x4, scoped, tag = 'scoped memory for tpu_custom_call.1']
    #allocation10 [shape = 'u8[131072]{0}', space=vmem, size = 0x20000, scoped, tag = 'output window, operand 0, single buffered']
    #allocation11 [shape = 'u8[131072]{0}', space=vmem, size = 0x20000, scoped, tag = 'output window, operand 1, single buffered']
    #allocation12 [shape = 's32[1]{0}', space=sflag, size = 0x4, scoped, tag = 'scoped memory for tpu_custom_call.1']
    %11 = vsyncpa [#allocation3], 0
    %12 = vsyncpa [#allocation6], 0
    %13 = vsyncpa [#allocation9], 0
    %14 = vsyncpa [#allocation4], 0
    %15 = vsyncpa [#allocation12], 0
    // Predicated region
    $region2: #{tpu_custom_call.1} parent=1 // pred_check
      _
    $region3: #{tpu_custom_call.1} parent=1 // pred_check_branch
      %17 = sbr.rel (0) target = $region5
    $region4: #{tpu_custom_call.1} parent=1 // pred_region
      %s19 = ssub.s32 128, 128
      %20 = vsyncadd [#allocation3], %s19
      %s22 = sshll.u32 [#allocation2], 4
      %s23 = int_to_ptr.vmem [resolvable:$true] %s22
      %25 = dma.hbm_to_vmem [thread:$0]  %s0, 128, %s23, [#allocation3]
    $region5: #{tpu_custom_call.1} parent=1 // pred_fallthru
      _
    // Predicated region
    $region6: #{tpu_custom_call.1} parent=1 // pred_check
      _
    $region7: #{tpu_custom_call.1} parent=1 // pred_check_branch
      %27 = sbr.rel (0) target = $region9
    $region8: #{tpu_custom_call.1} parent=1 // pred_region
      %s29 = ssub.s32 128, 128
      %30 = vsyncadd [#allocation6], %s29
      %s32 = sshll.u32 [#allocation5], 4
      %s33 = int_to_ptr.vmem [resolvable:$true] %s32
      %35 = dma.hbm_to_vmem [thread:$0]  %s1, 128, %s33, [#allocation6]
    $region9: #{tpu_custom_call.1} parent=1 // pred_fallthru
      _
    // Predicated region
    $region10: #{tpu_custom_call.1} parent=1 // pred_check
      _
    $region11: #{tpu_custom_call.1} parent=1 // pred_check_branch
      %37 = sbr.rel (0) target = $region13
    $region12: #{tpu_custom_call.1} parent=1 // pred_region
      %s39 = ssub.s32 256, 256
      %40 = vsyncadd [#allocation6], %s39
      %s41 = sshll.u32 [#allocation7], 4
      %s42 = int_to_ptr.vmem [resolvable:$true] %s41
      %47 = dma.hbm_to_vmem [thread:$0]  %s2, 256, %s42, [#allocation6], 128, 128, 8
    $region13: #{tpu_custom_call.1} parent=1 // pred_fallthru
      _
    // Predicated region
    $region14: #{tpu_custom_call.1} parent=1 // pred_check
      _
    $region15: #{tpu_custom_call.1} parent=1 // pred_check_branch
      %49 = sbr.rel (0) target = $region17
    $region16: #{tpu_custom_call.1} parent=1 // pred_region
      %s51 = ssub.s32 256, 256
      %52 = vsyncadd [#allocation9], %s51
      %s53 = sshll.u32 [#allocation8], 4
      %s54 = int_to_ptr.vmem [resolvable:$true] %s53
      %59 = dma.hbm_to_vmem [thread:$0]  %s3, 256, %s54, [#allocation9], 128, 128, 8
    $region17: #{tpu_custom_call.1} parent=1 // pred_fallthru
      _
    // Predicated region
    $region18: #{tpu_custom_call.1} parent=1 // pred_check
      _
    $region19: #{tpu_custom_call.1} parent=1 // pred_check_branch
      %61 = sbr.rel (0) target = $region21
    $region20: #{tpu_custom_call.1} parent=1 // pred_region
      %62 = dma.done [#allocation3], 128
    $region21: #{tpu_custom_call.1} parent=1 // pred_fallthru
      _
    // Predicated region
    $region22: #{tpu_custom_call.1} parent=1 // pred_check
      _
    $region23: #{tpu_custom_call.1} parent=1 // pred_check_branch
      %64 = sbr.rel (0) target = $region25
    $region24: #{tpu_custom_call.1} parent=1 // pred_region
      %65 = dma.done [#allocation6], 128
    $region25: #{tpu_custom_call.1} parent=1 // pred_fallthru
      _
    // Predicated region
    $region26: #{tpu_custom_call.1} parent=1 // pred_check
      _
    $region27: #{tpu_custom_call.1} parent=1 // pred_check_branch
      %67 = sbr.rel (0) target = $region29
    $region28: #{tpu_custom_call.1} parent=1 // pred_region
      %68 = dma.done [#allocation6], 256
    $region29: #{tpu_custom_call.1} parent=1 // pred_fallthru
      _
    // Predicated region
    $region30: #{tpu_custom_call.1} parent=1 // pred_check
      _
    $region31: #{tpu_custom_call.1} parent=1 // pred_check_branch
      %70 = sbr.rel (0) target = $region33
    $region32: #{tpu_custom_call.1} parent=1 // pred_region
      %71 = dma.done [#allocation9], 256
    $region33: #{tpu_custom_call.1} parent=1 // pred_fallthru
      _
    %v72 = vld [vmem:[#allocation2] sm:$0xff]
    %v73 = vld [vmem:[#allocation5] sm:$0xff]
    %v74 = vld [vmem:[#allocation7] sm:$0xff]
    %v75 = vld [vmem:[#allocation7 + $0x8] sm:$0xff]
    %v78 = vcombine.high %v74, %v74
    %v80 = vunpack.c.l.s4 1966171168
    %v81 = vunpack.c.0.s8 %v80
    %v82 = vlaneseq
    %v83 = vshrl.u32 %v82, 7
    %v84 = vsub.s32 %v81, %v83
    %v85 = vrot.slane %v74, %v84
    %v87 = vunpack.c.l.s4 1966171168
    %v88 = vunpack.c.0.s8 %v87
    %v89 = vlaneseq
    %v90 = vshrl.u32 %v89, 7
    %v91 = vsub.s32 %v88, %v90
    %v92 = vrot.slane %v78, %v91
    %v93 = vcombine.high %v85, %v85
    %v94 = vcombine.high %v92, %v92
    %v96 = vunpack.c.l.s4 1966171168
    %v97 = vunpack.c.0.s8 %v96
    %v98 = vlaneseq
    %v99 = vshrl.u32 %v98, 7
    %v100 = vsub.s32 %v97, %v99
    %v101 = vrot.slane %v85, %v100
    %v103 = vunpack.c.l.s4 1966171168
    %v104 = vunpack.c.0.s8 %v103
    %v105 = vlaneseq
    %v106 = vshrl.u32 %v105, 7
    %v107 = vsub.s32 %v104, %v106
    %v108 = vrot.slane %v92, %v107
    %v110 = vunpack.c.l.s4 1966171168
    %v111 = vunpack.c.0.s8 %v110
    %v112 = vlaneseq
    %v113 = vshrl.u32 %v112, 7
    %v114 = vsub.s32 %v111, %v113
    %v115 = vrot.slane %v93, %v114
    %v117 = vunpack.c.l.s4 1966171168
    %v118 = vunpack.c.0.s8 %v117
    %v119 = vlaneseq
    %v120 = vshrl.u32 %v119, 7
    %v121 = vsub.s32 %v118, %v120
    %v122 = vrot.slane %v94, %v121
    %v123 = vcombine.high %v101, %v101
    %v124 = vcombine.high %v108, %v108
    %v125 = vcombine.high %v115, %v115
    %v126 = vcombine.high %v122, %v122
    %v127 = vcombine.high %v75, %v75
    %v129 = vunpack.c.l.s4 1966171168
    %v130 = vunpack.c.0.s8 %v129
    %v131 = vlaneseq
    %v132 = vshrl.u32 %v131, 7
    %v133 = vsub.s32 %v130, %v132
    %v134 = vrot.slane %v75, %v133
    %v136 = vunpack.c.l.s4 1966171168
    %v137 = vunpack.c.0.s8 %v136
    %v138 = vlaneseq
    %v139 = vshrl.u32 %v138, 7
    %v140 = vsub.s32 %v137, %v139
    %v141 = vrot.slane %v127, %v140
    %v142 = vcombine.high %v134, %v134
    %v143 = vcombine.high %v141, %v141
    %v145 = vunpack.c.l.s4 1966171168
    %v146 = vunpack.c.0.s8 %v145
    %v147 = vlaneseq
    %v148 = vshrl.u32 %v147, 7
    %v149 = vsub.s32 %v146, %v148
    %v150 = vrot.slane %v134, %v149
    %v152 = vunpack.c.l.s4 1966171168
    %v153 = vunpack.c.0.s8 %v152
    %v154 = vlaneseq
    %v155 = vshrl.u32 %v154, 7
    %v156 = vsub.s32 %v153, %v155
    %v157 = vrot.slane %v141, %v156
    %v159 = vunpack.c.l.s4 1966171168
    %v160 = vunpack.c.0.s8 %v159
    %v161 = vlaneseq
    %v162 = vshrl.u32 %v161, 7
    %v163 = vsub.s32 %v160, %v162
    %v164 = vrot.slane %v142, %v163
    %v166 = vunpack.c.l.s4 1966171168
    %v167 = vunpack.c.0.s8 %v166
    %v168 = vlaneseq
    %v169 = vshrl.u32 %v168, 7
    %v170 = vsub.s32 %v167, %v169
    %v171 = vrot.slane %v143, %v170
    %v172 = vcombine.high %v150, %v150
    %v173 = vcombine.high %v157, %v157
    %v174 = vcombine.high %v164, %v164
    %v175 = vcombine.high %v171, %v171
    %v176 = vld [vmem:[#allocation8] sm:$0xff]
    %v177 = vld [vmem:[#allocation8 + $0x8] sm:$0xff]
    %v180 = vcombine.high %v176, %v176
    %v182 = vunpack.c.l.s4 1966171168
    %v183 = vunpack.c.0.s8 %v182
    %v184 = vlaneseq
    %v185 = vshrl.u32 %v184, 7
    %v186 = vsub.s32 %v183, %v185
    %v187 = vrot.slane %v176, %v186
    %v189 = vunpack.c.l.s4 1966171168
    %v190 = vunpack.c.0.s8 %v189
    %v191 = vlaneseq
    %v192 = vshrl.u32 %v191, 7
    %v193 = vsub.s32 %v190, %v192
    %v194 = vrot.slane %v180, %v193
    %v195 = vcombine.high %v187, %v187
    %v196 = vcombine.high %v194, %v194
    %v198 = vunpack.c.l.s4 1966171168
    %v199 = vunpack.c.0.s8 %v198
    %v200 = vlaneseq
    %v201 = vshrl.u32 %v200, 7
    %v202 = vsub.s32 %v199, %v201
    %v203 = vrot.slane %v187, %v202
    %v205 = vunpack.c.l.s4 1966171168
    %v206 = vunpack.c.0.s8 %v205
    %v207 = vlaneseq
    %v208 = vshrl.u32 %v207, 7
    %v209 = vsub.s32 %v206, %v208
    %v210 = vrot.slane %v194, %v209
    %v212 = vunpack.c.l.s4 1966171168
    %v213 = vunpack.c.0.s8 %v212
    %v214 = vlaneseq
    %v215 = vshrl.u32 %v214, 7
    %v216 = vsub.s32 %v213, %v215
    %v217 = vrot.slane %v195, %v216
    %v219 = vunpack.c.l.s4 1966171168
    %v220 = vunpack.c.0.s8 %v219
    %v221 = vlaneseq
    %v222 = vshrl.u32 %v221, 7
    %v223 = vsub.s32 %v220, %v222
    %v224 = vrot.slane %v196, %v223
    %v225 = vcombine.high %v203, %v203
    %v226 = vcombine.high %v210, %v210
    %v227 = vcombine.high %v217, %v217
    %v228 = vcombine.high %v224, %v224
    %v229 = vcombine.high %v177, %v177
    %v231 = vunpack.c.l.s4 1966171168
    %v232 = vunpack.c.0.s8 %v231
    %v233 = vlaneseq
    %v234 = vshrl.u32 %v233, 7
    %v235 = vsub.s32 %v232, %v234
    %v236 = vrot.slane %v177, %v235
    %v238 = vunpack.c.l.s4 1966171168
    %v239 = vunpack.c.0.s8 %v238
    %v240 = vlaneseq
    %v241 = vshrl.u32 %v240, 7
    %v242 = vsub.s32 %v239, %v241
    %v243 = vrot.slane %v229, %v242
    %v244 = vcombine.high %v236, %v236
    %v245 = vcombine.high %v243, %v243
    %v247 = vunpack.c.l.s4 1966171168
    %v248 = vunpack.c.0.s8 %v247
    %v249 = vlaneseq
    %v250 = vshrl.u32 %v249, 7
    %v251 = vsub.s32 %v248, %v250
    %v252 = vrot.slane %v236, %v251
    %v254 = vunpack.c.l.s4 1966171168
    %v255 = vunpack.c.0.s8 %v254
    %v256 = vlaneseq
    %v257 = vshrl.u32 %v256, 7
    %v258 = vsub.s32 %v255, %v257
    %v259 = vrot.slane %v243, %v258
    %v261 = vunpack.c.l.s4 1966171168
    %v262 = vunpack.c.0.s8 %v261
    %v263 = vlaneseq
    %v264 = vshrl.u32 %v263, 7
    %v265 = vsub.s32 %v262, %v264
    %v266 = vrot.slane %v244, %v265
    %v268 = vunpack.c.l.s4 1966171168
    %v269 = vunpack.c.0.s8 %v268
    %v270 = vlaneseq
    %v271 = vshrl.u32 %v270, 7
    %v272 = vsub.s32 %v269, %v271
    %v273 = vrot.slane %v245, %v272
    %v274 = vcombine.high %v252, %v252
    %v275 = vcombine.high %v259, %v259
    %v276 = vcombine.high %v266, %v266
    %v277 = vcombine.high %v273, %v273
    %v278 = vlaneseq
    %v279 = vshrl.u32 %v278, 7
    %v280 = vsub.s32 0, %v279
    %v281 = vrot.slane %v203, %v280
    %v282 = vlaneseq
    %v283 = vshrl.u32 %v282, 7
    %v284 = vsub.s32 0, %v283
    %v285 = vrot.slane %v217, %v284
    %v286 = vlaneseq
    %v287 = vshrl.u32 %v286, 7
    %v288 = vsub.s32 0, %v287
    %v289 = vrot.slane %v225, %v288
    %v290 = vlaneseq
    %v291 = vshrl.u32 %v290, 7
    %v292 = vsub.s32 0, %v291
    %v293 = vrot.slane %v227, %v292
    %v294 = vlaneseq
    %v295 = vshrl.u32 %v294, 7
    %v296 = vsub.s32 0, %v295
    %v297 = vrot.slane %v210, %v296
    %v298 = vlaneseq
    %v299 = vshrl.u32 %v298, 7
    %v300 = vsub.s32 0, %v299
    %v301 = vrot.slane %v224, %v300
    %v302 = vlaneseq
    %v303 = vshrl.u32 %v302, 7
    %v304 = vsub.s32 0, %v303
    %v305 = vrot.slane %v226, %v304
    %v306 = vlaneseq
    %v307 = vshrl.u32 %v306, 7
    %v308 = vsub.s32 0, %v307
    %v309 = vrot.slane %v228, %v308
    %v310 = vlaneseq
    %v311 = vshrl.u32 %v310, 7
    %v312 = vsub.s32 0, %v311
    %v313 = vrot.slane %v252, %v312
    %v314 = vlaneseq
    %v315 = vshrl.u32 %v314, 7
    %v316 = vsub.s32 0, %v315
    %v317 = vrot.slane %v266, %v316
    %v318 = vlaneseq
    %v319 = vshrl.u32 %v318, 7
    %v320 = vsub.s32 0, %v319
    %v321 = vrot.slane %v274, %v320
    %v322 = vlaneseq
    %v323 = vshrl.u32 %v322, 7
    %v324 = vsub.s32 0, %v323
    %v325 = vrot.slane %v276, %v324
    %v326 = vlaneseq
    %v327 = vshrl.u32 %v326, 7
    %v328 = vsub.s32 0, %v327
    %v329 = vrot.slane %v259, %v328
    %v330 = vlaneseq
    %v331 = vshrl.u32 %v330, 7
    %v332 = vsub.s32 0, %v331
    %v333 = vrot.slane %v273, %v332
    %v334 = vlaneseq
    %v335 = vshrl.u32 %v334, 7
    %v336 = vsub.s32 0, %v335
    %v337 = vrot.slane %v275, %v336
    %v338 = vlaneseq
    %v339 = vshrl.u32 %v338, 7
    %v340 = vsub.s32 0, %v339
    %v341 = vrot.slane %v277, %v340
    %v358 = vmul.f32 %v281, %v73
    %v359 = vmul.f32 %v285, %v73
    %v360 = vmul.f32 %v289, %v73
    %v361 = vmul.f32 %v293, %v73
    %v362 = vmul.f32 %v297, %v73
    %v363 = vmul.f32 %v301, %v73
    %v364 = vmul.f32 %v305, %v73
    %v365 = vmul.f32 %v309, %v73
    %v366 = vmul.f32 %v313, %v73
    %v367 = vmul.f32 %v317, %v73
    %v368 = vmul.f32 %v321, %v73
    %v369 = vmul.f32 %v325, %v73
    %v370 = vmul.f32 %v329, %v73
    %v371 = vmul.f32 %v333, %v73
    %v372 = vmul.f32 %v337, %v73
    %v373 = vmul.f32 %v341, %v73
    %374 = vst [vmem:[#allocation10] sm:$0xff] %v358
    %375 = vst [vmem:[#allocation10 + $0x8] sm:$0xff] %v359
    %376 = vst [vmem:[#allocation10 + $0x10] sm:$0xff] %v360
    %377 = vst [vmem:[#allocation10 + $0x18] sm:$0xff] %v361
    %378 = vst [vmem:[#allocation10 + $0x20] sm:$0xff] %v362
    %379 = vst [vmem:[#allocation10 + $0x28] sm:$0xff] %v363
    %380 = vst [vmem:[#allocation10 + $0x30] sm:$0xff] %v364
    %381 = vst [vmem:[#allocation10 + $0x38] sm:$0xff] %v365
    %382 = vst [vmem:[#allocation10 + $0x40] sm:$0xff] %v366
    %383 = vst [vmem:[#allocation10 + $0x48] sm:$0xff] %v367
    %384 = vst [vmem:[#allocation10 + $0x50] sm:$0xff] %v368
    %385 = vst [vmem:[#allocation10 + $0x58] sm:$0xff] %v369
    %386 = vst [vmem:[#allocation10 + $0x60] sm:$0xff] %v370
    %387 = vst [vmem:[#allocation10 + $0x68] sm:$0xff] %v371
    %388 = vst [vmem:[#allocation10 + $0x70] sm:$0xff] %v372
    %389 = vst [vmem:[#allocation10 + $0x78] sm:$0xff] %v373
    %v390 = vlaneseq
    %v391 = vshrl.u32 %v390, 7
    %v392 = vsub.s32 0, %v391
    %v393 = vrot.slane %v101, %v392
    %v394 = vlaneseq
    %v395 = vshrl.u32 %v394, 7
    %v396 = vsub.s32 0, %v395
    %v397 = vrot.slane %v115, %v396
    %v398 = vlaneseq
    %v399 = vshrl.u32 %v398, 7
    %v400 = vsub.s32 0, %v399
    %v401 = vrot.slane %v123, %v400
    %v402 = vlaneseq
    %v403 = vshrl.u32 %v402, 7
    %v404 = vsub.s32 0, %v403
    %v405 = vrot.slane %v125, %v404
    %v406 = vlaneseq
    %v407 = vshrl.u32 %v406, 7
    %v408 = vsub.s32 0, %v407
    %v409 = vrot.slane %v108, %v408
    %v410 = vlaneseq
    %v411 = vshrl.u32 %v410, 7
    %v412 = vsub.s32 0, %v411
    %v413 = vrot.slane %v122, %v412
    %v414 = vlaneseq
    %v415 = vshrl.u32 %v414, 7
    %v416 = vsub.s32 0, %v415
    %v417 = vrot.slane %v124, %v416
    %v418 = vlaneseq
    %v419 = vshrl.u32 %v418, 7
    %v420 = vsub.s32 0, %v419
    %v421 = vrot.slane %v126, %v420
    %v422 = vlaneseq
    %v423 = vshrl.u32 %v422, 7
    %v424 = vsub.s32 0, %v423
    %v425 = vrot.slane %v150, %v424
    %v426 = vlaneseq
    %v427 = vshrl.u32 %v426, 7
    %v428 = vsub.s32 0, %v427
    %v429 = vrot.slane %v164, %v428
    %v430 = vlaneseq
    %v431 = vshrl.u32 %v430, 7
    %v432 = vsub.s32 0, %v431
    %v433 = vrot.slane %v172, %v432
    %v434 = vlaneseq
    %v435 = vshrl.u32 %v434, 7
    %v436 = vsub.s32 0, %v435
    %v437 = vrot.slane %v174, %v436
    %v438 = vlaneseq
    %v439 = vshrl.u32 %v438, 7
    %v440 = vsub.s32 0, %v439
    %v441 = vrot.slane %v157, %v440
    %v442 = vlaneseq
    %v443 = vshrl.u32 %v442, 7
    %v444 = vsub.s32 0, %v443
    %v445 = vrot.slane %v171, %v444
    %v446 = vlaneseq
    %v447 = vshrl.u32 %v446, 7
    %v448 = vsub.s32 0, %v447
    %v449 = vrot.slane %v173, %v448
    %v450 = vlaneseq
    %v451 = vshrl.u32 %v450, 7
    %v452 = vsub.s32 0, %v451
    %v453 = vrot.slane %v175, %v452
    %v470 = vmul.f32 %v393, %v72
    %v471 = vmul.f32 %v397, %v72
    %v472 = vmul.f32 %v401, %v72
    %v473 = vmul.f32 %v405, %v72
    %v474 = vmul.f32 %v409, %v72
    %v475 = vmul.f32 %v413, %v72
    %v476 = vmul.f32 %v417, %v72
    %v477 = vmul.f32 %v421, %v72
    %v478 = vmul.f32 %v425, %v72
    %v479 = vmul.f32 %v429, %v72
    %v480 = vmul.f32 %v433, %v72
    %v481 = vmul.f32 %v437, %v72
    %v482 = vmul.f32 %v441, %v72
    %v483 = vmul.f32 %v445, %v72
    %v484 = vmul.f32 %v449, %v72
    %v485 = vmul.f32 %v453, %v72
    %s486 = scalar_lea.vmem [#allocation10], 128
    %487 = vst [vmem:[%s486] sm:$0xff] %v470
    %488 = vst [vmem:[%s486 + $0x8] sm:$0xff] %v471
    %489 = vst [vmem:[%s486 + $0x10] sm:$0xff] %v472
    %490 = vst [vmem:[%s486 + $0x18] sm:$0xff] %v473
    %491 = vst [vmem:[%s486 + $0x20] sm:$0xff] %v474
    %492 = vst [vmem:[%s486 + $0x28] sm:$0xff] %v475
    %493 = vst [vmem:[%s486 + $0x30] sm:$0xff] %v476
    %494 = vst [vmem:[%s486 + $0x38] sm:$0xff] %v477
    %495 = vst [vmem:[%s486 + $0x40] sm:$0xff] %v478
    %496 = vst [vmem:[%s486 + $0x48] sm:$0xff] %v479
    %497 = vst [vmem:[%s486 + $0x50] sm:$0xff] %v480
    %498 = vst [vmem:[%s486 + $0x58] sm:$0xff] %v481
    %499 = vst [vmem:[%s486 + $0x60] sm:$0xff] %v482
    %500 = vst [vmem:[%s486 + $0x68] sm:$0xff] %v483
    %501 = vst [vmem:[%s486 + $0x70] sm:$0xff] %v484
    %502 = vst [vmem:[%s486 + $0x78] sm:$0xff] %v485
    %v503 = vmul.f32 %v393, %v73
    %v504 = vmul.f32 %v397, %v73
    %v505 = vmul.f32 %v401, %v73
    %v506 = vmul.f32 %v405, %v73
    %v507 = vmul.f32 %v409, %v73
    %v508 = vmul.f32 %v413, %v73
    %v509 = vmul.f32 %v417, %v73
    %v510 = vmul.f32 %v421, %v73
    %v511 = vmul.f32 %v425, %v73
    %v512 = vmul.f32 %v429, %v73
    %v513 = vmul.f32 %v433, %v73
    %v514 = vmul.f32 %v437, %v73
    %v515 = vmul.f32 %v441, %v73
    %v516 = vmul.f32 %v445, %v73
    %v517 = vmul.f32 %v449, %v73
    %v518 = vmul.f32 %v453, %v73
    %519 = vst [vmem:[#allocation11] sm:$0xff] %v503
    %520 = vst [vmem:[#allocation11 + $0x8] sm:$0xff] %v504
    %521 = vst [vmem:[#allocation11 + $0x10] sm:$0xff] %v505
    %522 = vst [vmem:[#allocation11 + $0x18] sm:$0xff] %v506
    %523 = vst [vmem:[#allocation11 + $0x20] sm:$0xff] %v507
    %524 = vst [vmem:[#allocation11 + $0x28] sm:$0xff] %v508
    %525 = vst [vmem:[#allocation11 + $0x30] sm:$0xff] %v509
    %526 = vst [vmem:[#allocation11 + $0x38] sm:$0xff] %v510
    %527 = vst [vmem:[#allocation11 + $0x40] sm:$0xff] %v511
    %528 = vst [vmem:[#allocation11 + $0x48] sm:$0xff] %v512
    %529 = vst [vmem:[#allocation11 + $0x50] sm:$0xff] %v513
    %530 = vst [vmem:[#allocation11 + $0x58] sm:$0xff] %v514
    %531 = vst [vmem:[#allocation11 + $0x60] sm:$0xff] %v515
    %532 = vst [vmem:[#allocation11 + $0x68] sm:$0xff] %v516
    %533 = vst [vmem:[#allocation11 + $0x70] sm:$0xff] %v517
    %534 = vst [vmem:[#allocation11 + $0x78] sm:$0xff] %v518
    %v535 = vmul.f32 %v281, %v72
    %v536 = vmul.f32 %v285, %v72
    %v537 = vmul.f32 %v289, %v72
    %v538 = vmul.f32 %v293, %v72
    %v539 = vmul.f32 %v297, %v72
    %v540 = vmul.f32 %v301, %v72
    %v541 = vmul.f32 %v305, %v72
    %v542 = vmul.f32 %v309, %v72
    %v543 = vmul.f32 %v313, %v72
    %v544 = vmul.f32 %v317, %v72
    %v545 = vmul.f32 %v321, %v72
    %v546 = vmul.f32 %v325, %v72
    %v547 = vmul.f32 %v329, %v72
    %v548 = vmul.f32 %v333, %v72
    %v549 = vmul.f32 %v337, %v72
    %v550 = vmul.f32 %v341, %v72
    %s551 = scalar_lea.vmem [#allocation11], 128
    %552 = vst [vmem:[%s551] sm:$0xff] %v535
    %553 = vst [vmem:[%s551 + $0x8] sm:$0xff] %v536
    %554 = vst [vmem:[%s551 + $0x10] sm:$0xff] %v537
    %555 = vst [vmem:[%s551 + $0x18] sm:$0xff] %v538
    %556 = vst [vmem:[%s551 + $0x20] sm:$0xff] %v539
    %557 = vst [vmem:[%s551 + $0x28] sm:$0xff] %v540
    %558 = vst [vmem:[%s551 + $0x30] sm:$0xff] %v541
    %559 = vst [vmem:[%s551 + $0x38] sm:$0xff] %v542
    %560 = vst [vmem:[%s551 + $0x40] sm:$0xff] %v543
    %561 = vst [vmem:[%s551 + $0x48] sm:$0xff] %v544
    %562 = vst [vmem:[%s551 + $0x50] sm:$0xff] %v545
    %563 = vst [vmem:[%s551 + $0x58] sm:$0xff] %v546
    %564 = vst [vmem:[%s551 + $0x60] sm:$0xff] %v547
    %565 = vst [vmem:[%s551 + $0x68] sm:$0xff] %v548
    %566 = vst [vmem:[%s551 + $0x70] sm:$0xff] %v549
    %567 = vst [vmem:[%s551 + $0x78] sm:$0xff] %v550
    // Predicated region
    $region34: #{tpu_custom_call.1} parent=1 // pred_check
      _
    $region35: #{tpu_custom_call.1} parent=1 // pred_check_branch
      %569 = sbr.rel (0) target = $region37
    $region36: #{tpu_custom_call.1} parent=1 // pred_region
      %s571 = ssub.s32 4096, 4096
      %572 = vsyncadd [#allocation4], %s571
      %s573 = sshll.u32 [#allocation10], 4
      %s574 = int_to_ptr.vmem [resolvable:$true] %s573
      %579 = dma.vmem_to_hbm [thread:$0]  %s574, 4096, %s4, [#allocation4], 128, 128, 8
    $region37: #{tpu_custom_call.1} parent=1 // pred_fallthru
      _
    // Predicated region
    $region38: #{tpu_custom_call.1} parent=1 // pred_check
      _
    $region39: #{tpu_custom_call.1} parent=1 // pred_check_branch
      %581 = sbr.rel (0) target = $region41
    $region40: #{tpu_custom_call.1} parent=1 // pred_region
      %s583 = ssub.s32 4096, 4096
      %584 = vsyncadd [#allocation12], %s583
      %s585 = sshll.u32 [#allocation11], 4
      %s586 = int_to_ptr.vmem [resolvable:$true] %s585
      %591 = dma.vmem_to_hbm [thread:$0]  %s586, 4096, %s5, [#allocation12], 128, 128, 8
    $region41: #{tpu_custom_call.1} parent=1 // pred_fallthru
      _
    // Predicated region
    $region42: #{tpu_custom_call.1} parent=1 // pred_check
      _
    $region43: #{tpu_custom_call.1} parent=1 // pred_check_branch
      %593 = sbr.rel (0) target = $region45
    $region44: #{tpu_custom_call.1} parent=1 // pred_region
      %594 = dma.done [#allocation4], 4096
    $region45: #{tpu_custom_call.1} parent=1 // pred_fallthru
      _
    // Predicated region
    $region46: #{tpu_custom_call.1} parent=1 // pred_check
      _
    $region47: #{tpu_custom_call.1} parent=1 // pred_check_branch
      %596 = sbr.rel (0) target = $region49
    $region48: #{tpu_custom_call.1} parent=1 // pred_region
      %597 = dma.done [#allocation12], 4096
    $region49: #{tpu_custom_call.1} parent=1 // pred_fallthru
      _
    %598 = vsyncpa [#allocation3], 1
    %599 = vsyncpa [#allocation6], 1
    %600 = vsyncpa [#allocation9], 1
    %601 = vsyncpa [#allocation4], 1
    %602 = vsyncpa [#allocation12], 1

</llo_original>
